<compile_context>
chip_gen: v5e
topology: v5e:2x2
jax: 0.10.0
libtpu: 0.0.40
codegen_flags: <defaults>
</compile_context>

<pallas_src>
import jax
import jax.numpy as jnp
import numpy as np
from jax.experimental import pallas as pl
from jax.experimental.pallas import tpu as pltpu

EPS = 1e-5
NEG_SLOPE = 0.01                          # nn.LeakyReLU default negative_slope
OUT_DIMS = [256, 128, 64, 32, 16, 8, 1]   # layer output widths
N_BN = 6                                  # number of BatchNorm layers
PAD0 = 256                                # layer-0 / vec-slab lane width
HID = 128                                 # hidden lane width for layers 1..6
REST_ROWS = (256, 128, 128, 128, 128)     # slab row counts for layers 1..5
VEC_ROWS = 16                             # 6 gamma + 6 beta + w6 row + b6 row, padded
MATMUL_DTYPE = jnp.bfloat16               # MXU operand dtype (accumulate in f32)


def _bn_leaky(z, gamma, beta, inv_b):
    """Fused train-mode BatchNorm (one-pass stats) + LeakyReLU, all f32."""
    mean = jnp.sum(z, axis=0, keepdims=True) * inv_b
    ex2 = jnp.sum(z * z, axis=0, keepdims=True) * inv_b
    var = jnp.maximum(ex2 - mean * mean, 0.0)
    scale = gamma * jax.lax.rsqrt(var + EPS)
    shift = beta - mean * scale
    h = z * scale + shift
    return jnp.where(h >= 0, h, NEG_SLOPE * h)


def mlp_kernel(x_ref, w0_ref, wr_ref, v_ref, o_ref):
    """Whole forward pass in a single gridless invocation (all data in VMEM).

    x_ref : (B, input_dim)  f32
    w0_ref: (input_dim, 256) bf16   layer-0 weight
    wr_ref: (768, 128)       bf16   layers 1-5 weights, rows/cols zero-padded
    v_ref : (16, 256)        f32    rows 0..5 gamma, 6..11 beta, 12 w6^T, 13 b6
    o_ref : (B, 128)         f32    lane-dense output slab (real result in col 0)
    """
    B = x_ref.shape[0]
    inv_b = 1.0 / B

    # ---- Layer 0: (B, in) @ (in, 256) on the MXU, BN0 + LeakyReLU at 256 lanes.
    z = jnp.dot(x_ref[...].astype(w0_ref.dtype), w0_ref[...],
                preferred_element_type=jnp.float32)                       # (B, 256)
    h = _bn_leaky(z, v_ref[0:1, :], v_ref[N_BN:N_BN + 1, :], inv_b)

    # ---- Layers 1..5: 128-lane hidden width, no sub-128-lane LHS slices.
    # Padded weight rows/cols are zero, and padded gamma/beta are zero, so the
    # padded features stay exactly 0 through every layer.
    off = 0
    for li in range(1, 6):
        rows = REST_ROWS[li - 1]
        w = wr_ref[off:off + rows, :]                                      # static slice
        off += rows
        z = jnp.dot(h.astype(wr_ref.dtype), w,
                    preferred_element_type=jnp.float32)                    # (B, 128)
        gamma = v_ref[li:li + 1, :HID]
        beta = v_ref[N_BN + li:N_BN + li + 1, :HID]
        h = _bn_leaky(z, gamma, beta, inv_b)

    # ---- Layer 6 (8 -> 1): skip the MXU; VPU multiply + XLU lane reduction.
    w6 = v_ref[2 * N_BN:2 * N_BN + 1, :HID]                                # (1, 128)
    b6 = v_ref[2 * N_BN + 1:2 * N_BN + 2, :HID]                            # (1, 128)
    z = jnp.sum(h * w6, axis=-1, keepdims=True)                            # (B, 1)
    o_ref[...] = (z + b6).astype(o_ref.dtype)                              # (B, 128) unmasked vst


def init_params(key, input_dim):
    """Synthetic parameters matching the torch module's shapes.

    Per layer: [W (in,out), b (1,out)] and, for layers 0..5, [gamma, beta].
    gamma/beta are perturbed away from torch defaults (1, 0) so the BN affine
    path is actually exercised.
    """
    dims = [input_dim] + OUT_DIMS
    params = []
    for i in range(len(OUT_DIMS)):
        key, kw, kb, kg, kbt = jax.random.split(key, 5)
        fan_in = dims[i]
        w = jax.random.normal(kw, (dims[i], dims[i + 1]), jnp.float32) / jnp.sqrt(
            jnp.float32(fan_in))
        b = 0.01 * jax.random.normal(kb, (1, dims[i + 1]), jnp.float32)
        params += [w, b]
        if i < len(OUT_DIMS) - 1:
            gamma = 1.0 + 0.1 * jax.random.normal(kg, (1, dims[i + 1]), jnp.float32)
            beta = 0.1 * jax.random.normal(kbt, (1, dims[i + 1]), jnp.float32)
            params += [gamma, beta]
    return params


def pack_params(params, input_dim):
    """Pack the 26 tensors into three slabs (host-side, once).

    w0_packed : (input_dim, 256) bf16   layer-0 weight.
    wr_packed : (768, 128)       bf16   layers 1-5; layer li occupies
                REST_ROWS[li-1] rows, real rows/cols zero-padded to the slab.
    vec_packed: (16, 256)        f32    rows 0..5 gamma, 6..11 beta (zero-padded
                -> padded features get scale=shift=0), row 12 = w6^T,
                row 13 = last-layer bias broadcast across lanes.
    """
    dims = [input_dim] + OUT_DIMS
    n = len(OUT_DIMS)
    idx = 0
    rest_blocks, gammas, betas = [], [], []
    w0 = w6 = b6 = None
    for li in range(n):
        w, b = params[idx], params[idx + 1]
        idx += 2
        dout = OUT_DIMS[li]
        if li == 0:
            w0 = w
        elif li < n - 1:
            rows = REST_ROWS[li - 1]
            din = dims[li]
            rest_blocks.append(jnp.pad(w, ((0, rows - din), (0, HID - dout))))
        else:
            w6, b6 = w, b
        if li < n - 1:
            g, bt = params[idx], params[idx + 1]
            idx += 2
            gammas.append(jnp.pad(g, ((0, 0), (0, PAD0 - dout))))
            betas.append(jnp.pad(bt, ((0, 0), (0, PAD0 - dout))))

    w0_packed = w0.astype(MATMUL_DTYPE)
    wr_packed = jnp.concatenate(rest_blocks, axis=0).astype(MATMUL_DTYPE)

    w6_row = jnp.pad(w6.T, ((0, 0), (0, PAD0 - w6.shape[0])))       # (1, 256)
    b6_row = jnp.broadcast_to(b6.reshape(1, 1), (1, PAD0))          # (1, 256)
    vec_rows = gammas + betas + [w6_row, b6_row]
    fill = jnp.zeros((VEC_ROWS - len(vec_rows), PAD0), jnp.float32)
    vec_packed = jnp.concatenate(vec_rows + [fill], axis=0).astype(jnp.float32)
    return w0_packed, wr_packed, vec_packed


@jax.jit
def mynet_forward(x, w0_packed, wr_packed, vec_packed):
    """Single gridless pallas_call; everything lives in VMEM (tiny footprint)."""
    B, input_dim = x.shape
    in_dims = [input_dim] + OUT_DIMS[:-1]
    flops = 2 * B * sum(d_in * d_out for d_in, d_out in zip(in_dims, OUT_DIMS))
    bytes_accessed = (
        x.size * x.dtype.itemsize
        + w0_packed.size * w0_packed.dtype.itemsize
        + wr_packed.size * wr_packed.dtype.itemsize
        + vec_packed.size * vec_packed.dtype.itemsize
        + B * HID * 4)
    out_pad = pl.pallas_call(
        mlp_kernel,
        out_shape=jax.ShapeDtypeStruct((B, HID), jnp.float32),
        in_specs=[pl.BlockSpec(memory_space=pltpu.MemorySpace.VMEM)] * 4,
        out_specs=pl.BlockSpec(memory_space=pltpu.MemorySpace.VMEM),
        cost_estimate=pl.CostEstimate(
            flops=flops,
            transcendentals=PAD0 + 5 * HID,          # rsqrt per BN feature
            bytes_accessed=bytes_accessed),
    )(x, w0_packed, wr_packed, vec_packed)
    # Real output is column 0; slice inside the jit so XLA fuses it and the
    # in-kernel store stays lane-dense (no masked 1-lane vst).
    return out_pad[:, :1]


def mynet_reference(x, params, matmul_dtype=jnp.float32):
    """Pure-JAX reference, faithful to the PyTorch module (train-mode BN).

    matmul_dtype lets the reference mirror the kernel's bf16 MXU operands
    (layers 0-5); the kernel's last layer is a f32 VPU reduction, so it stays
    f32 here too.  matmul_dtype=float32 gives exact f32 semantics.
    """
    h = x
    idx = 0
    n = len(OUT_DIMS)
    for li in range(n):
        w, b = params[idx], params[idx + 1]
        idx += 2
        mm_dtype = matmul_dtype if li < n - 1 else jnp.float32
        z = jnp.dot(h.astype(mm_dtype), w.astype(mm_dtype),
                    preferred_element_type=jnp.float32) + b
        if li < n - 1:
            gamma, beta = params[idx], params[idx + 1]
            idx += 2
            mean = jnp.mean(z, axis=0, keepdims=True)
            var = jnp.mean((z - mean) ** 2, axis=0, keepdims=True)
            h = (z - mean) * jax.lax.rsqrt(var + EPS) * gamma + beta
            h = jnp.where(h >= 0, h, NEG_SLOPE * h)
        else:
            h = z
    return h


if __name__ == "__main__":
    key = jax.random.PRNGKey(0)
    k_x, k_p = jax.random.split(key)

    B, INPUT_DIM = 8, 32
    x = jax.random.normal(k_x, (B, INPUT_DIM), jnp.float32)
    params = init_params(k_p, INPUT_DIM)
    w0_packed, wr_packed, vec_packed = pack_params(params, INPUT_DIM)

    out = jax.block_until_ready(mynet_forward(x, w0_packed, wr_packed, vec_packed))

    # Tight check vs. a reference with matched MXU-operand dtype: verifies the
    # slab packing, the bias-drop cancellation, the zero-padded-feature
    # invariant and the fused one-pass BatchNorm.
    ref_matched = jax.block_until_ready(
        mynet_reference(x, params, matmul_dtype=MATMUL_DTYPE))
    np.testing.assert_allclose(np.asarray(out), np.asarray(ref_matched),
                               rtol=1e-2, atol=1e-2)

    # Loose sanity check vs. the exact-f32 PyTorch semantics: the only
    # deviation is bf16 rounding of the MXU operands.
    ref_exact = jax.block_until_ready(mynet_reference(x, params))
    np.testing.assert_allclose(np.asarray(out), np.asarray(ref_exact),
                               rtol=2e-1, atol=2e-1)

    assert out.shape == (B, 1) and out.dtype == jnp.float32
    # TODO(synk): BatchNorm running_mean/running_var buffer updates (a training
    # side effect, unused by this forward) are not emitted.
    print("KERNEL_OK")
</pallas_src>

<mosaic_0001>
module attributes {stable_mosaic.version = 11 : i64} {
  func.func @mlp_kernel(%arg0: memref<8x32xf32, #tpu.memory_space<vmem>>, %arg1: memref<32x256xbf16, #tpu.memory_space<vmem>>, %arg2: memref<768x128xbf16, #tpu.memory_space<vmem>>, %arg3: memref<16x256xf32, #tpu.memory_space<vmem>>, %arg4: memref<8x128xf32, #tpu.memory_space<vmem>>) attributes {dimension_semantics = [], scalar_prefetch = 0 : i64, scratch_operands = 0 : i64, tpu.core_type = #tpu.core_type<tc>} {
    %c0 = arith.constant 0 : index
    %c0_0 = arith.constant 0 : index
    %0 = vector.load %arg0[%c0, %c0_0] : memref<8x32xf32, #tpu.memory_space<vmem>>, vector<8x32xf32>
    %1 = arith.truncf %0 : vector<8x32xf32> to vector<8x32xbf16>
    %c0_1 = arith.constant 0 : index
    %c0_2 = arith.constant 0 : index
    %2 = vector.load %arg1[%c0_1, %c0_2] : memref<32x256xbf16, #tpu.memory_space<vmem>>, vector<32x256xbf16>
    %cst = arith.constant dense<0.000000e+00> : vector<8x256xf32>
    %3 = tpu.matmul %1, %2, %cst {dimension_numbers = #tpu.dot_dimension_numbers<[1], [0], [0], [1], [0, 0, 1, 1], [], []>} : vector<8x32xbf16>, vector<32x256xbf16>, vector<8x256xf32> -> vector<8x256xf32>
    %c0_3 = arith.constant 0 : index
    %c0_4 = arith.constant 0 : index
    %4 = vector.load %arg3[%c0_3, %c0_4] : memref<16x256xf32, #tpu.memory_space<vmem>>, vector<1x256xf32>
    %c6 = arith.constant 6 : index
    %c0_5 = arith.constant 0 : index
    %5 = vector.load %arg3[%c6, %c0_5] : memref<16x256xf32, #tpu.memory_space<vmem>>, vector<1x256xf32>
    %cst_6 = arith.constant dense<0.000000e+00> : vector<256xf32>
    %6 = vector.multi_reduction <add>, %3, %cst_6 [0] : vector<8x256xf32> to vector<256xf32>
    %7 = vector.shape_cast %6 : vector<256xf32> to vector<1x256xf32>
    %cst_7 = arith.constant 1.250000e-01 : f32
    %8 = vector.broadcast %cst_7 : f32 to vector<1x256xf32>
    %9 = arith.mulf %7, %8 : vector<1x256xf32>
    %10 = arith.mulf %3, %3 : vector<8x256xf32>
    %cst_8 = arith.constant dense<0.000000e+00> : vector<256xf32>
    %11 = vector.multi_reduction <add>, %10, %cst_8 [0] : vector<8x256xf32> to vector<256xf32>
    %12 = vector.shape_cast %11 : vector<256xf32> to vector<1x256xf32>
    %cst_9 = arith.constant 1.250000e-01 : f32
    %13 = vector.broadcast %cst_9 : f32 to vector<1x256xf32>
    %14 = arith.mulf %12, %13 : vector<1x256xf32>
    %15 = arith.mulf %9, %9 : vector<1x256xf32>
    %16 = arith.subf %14, %15 : vector<1x256xf32>
    %cst_10 = arith.constant 0.000000e+00 : f32
    %17 = vector.broadcast %cst_10 : f32 to vector<1x256xf32>
    %18 = arith.maximumf %16, %17 : vector<1x256xf32>
    %cst_11 = arith.constant 9.99999974E-6 : f32
    %19 = vector.broadcast %cst_11 : f32 to vector<1x256xf32>
    %20 = arith.addf %18, %19 : vector<1x256xf32>
    %21 = math.rsqrt %20 : vector<1x256xf32>
    %22 = arith.mulf %4, %21 : vector<1x256xf32>
    %23 = arith.mulf %9, %22 : vector<1x256xf32>
    %24 = arith.subf %5, %23 : vector<1x256xf32>
    %25 = vector.broadcast %22 : vector<1x256xf32> to vector<8x256xf32>
    %26 = arith.mulf %3, %25 : vector<8x256xf32>
    %27 = vector.broadcast %24 : vector<1x256xf32> to vector<8x256xf32>
    %28 = arith.addf %26, %27 : vector<8x256xf32>
    %cst_12 = arith.constant 0.000000e+00 : f32
    %29 = vector.broadcast %cst_12 : f32 to vector<8x256xf32>
    %30 = arith.cmpf oge, %28, %29 : vector<8x256xf32>
    %cst_13 = arith.constant 0.00999999977 : f32
    %31 = vector.broadcast %cst_13 : f32 to vector<8x256xf32>
    %32 = arith.mulf %31, %28 : vector<8x256xf32>
    %33 = arith.select %30, %28, %32 : vector<8x256xi1>, vector<8x256xf32>
    %c0_14 = arith.constant 0 : index
    %c0_15 = arith.constant 0 : index
    %34 = vector.load %arg2[%c0_14, %c0_15] : memref<768x128xbf16, #tpu.memory_space<vmem>>, vector<256x128xbf16>
    %35 = arith.truncf %33 : vector<8x256xf32> to vector<8x256xbf16>
    %cst_16 = arith.constant dense<0.000000e+00> : vector<8x128xf32>
    %36 = tpu.matmul %35, %34, %cst_16 {dimension_numbers = #tpu.dot_dimension_numbers<[1], [0], [0], [1], [0, 0, 1, 1], [], []>} : vector<8x256xbf16>, vector<256x128xbf16>, vector<8x128xf32> -> vector<8x128xf32>
    %c1 = arith.constant 1 : index
    %c0_17 = arith.constant 0 : index
    %37 = vector.load %arg3[%c1, %c0_17] : memref<16x256xf32, #tpu.memory_space<vmem>>, vector<1x128xf32>
    %c7 = arith.constant 7 : index
    %c0_18 = arith.constant 0 : index
    %38 = vector.load %arg3[%c7, %c0_18] : memref<16x256xf32, #tpu.memory_space<vmem>>, vector<1x128xf32>
    %cst_19 = arith.constant dense<0.000000e+00> : vector<128xf32>
    %39 = vector.multi_reduction <add>, %36, %cst_19 [0] : vector<8x128xf32> to vector<128xf32>
    %40 = vector.shape_cast %39 : vector<128xf32> to vector<1x128xf32>
    %cst_20 = arith.constant 1.250000e-01 : f32
    %41 = vector.broadcast %cst_20 : f32 to vector<1x128xf32>
    %42 = arith.mulf %40, %41 : vector<1x128xf32>
    %43 = arith.mulf %36, %36 : vector<8x128xf32>
    %cst_21 = arith.constant dense<0.000000e+00> : vector<128xf32>
    %44 = vector.multi_reduction <add>, %43, %cst_21 [0] : vector<8x128xf32> to vector<128xf32>
    %45 = vector.shape_cast %44 : vector<128xf32> to vector<1x128xf32>
    %cst_22 = arith.constant 1.250000e-01 : f32
    %46 = vector.broadcast %cst_22 : f32 to vector<1x128xf32>
    %47 = arith.mulf %45, %46 : vector<1x128xf32>
    %48 = arith.mulf %42, %42 : vector<1x128xf32>
    %49 = arith.subf %47, %48 : vector<1x128xf32>
    %cst_23 = arith.constant 0.000000e+00 : f32
    %50 = vector.broadcast %cst_23 : f32 to vector<1x128xf32>
    %51 = arith.maximumf %49, %50 : vector<1x128xf32>
    %cst_24 = arith.constant 9.99999974E-6 : f32
    %52 = vector.broadcast %cst_24 : f32 to vector<1x128xf32>
    %53 = arith.addf %51, %52 : vector<1x128xf32>
    %54 = math.rsqrt %53 : vector<1x128xf32>
    %55 = arith.mulf %37, %54 : vector<1x128xf32>
    %56 = arith.mulf %42, %55 : vector<1x128xf32>
    %57 = arith.subf %38, %56 : vector<1x128xf32>
    %58 = vector.broadcast %55 : vector<1x128xf32> to vector<8x128xf32>
    %59 = arith.mulf %36, %58 : vector<8x128xf32>
    %60 = vector.broadcast %57 : vector<1x128xf32> to vector<8x128xf32>
    %61 = arith.addf %59, %60 : vector<8x128xf32>
    %cst_25 = arith.constant 0.000000e+00 : f32
    %62 = vector.broadcast %cst_25 : f32 to vector<8x128xf32>
    %63 = arith.cmpf oge, %61, %62 : vector<8x128xf32>
    %cst_26 = arith.constant 0.00999999977 : f32
    %64 = vector.broadcast %cst_26 : f32 to vector<8x128xf32>
    %65 = arith.mulf %64, %61 : vector<8x128xf32>
    %66 = arith.select %63, %61, %65 : vector<8x128xi1>, vector<8x128xf32>
    %c256 = arith.constant 256 : index
    %c0_27 = arith.constant 0 : index
    %67 = vector.load %arg2[%c256, %c0_27] : memref<768x128xbf16, #tpu.memory_space<vmem>>, vector<128x128xbf16>
    %68 = arith.truncf %66 : vector<8x128xf32> to vector<8x128xbf16>
    %cst_28 = arith.constant dense<0.000000e+00> : vector<8x128xf32>
    %69 = tpu.matmul %68, %67, %cst_28 {dimension_numbers = #tpu.dot_dimension_numbers<[1], [0], [0], [1], [0, 0, 1, 1], [], []>} : vector<8x128xbf16>, vector<128x128xbf16>, vector<8x128xf32> -> vector<8x128xf32>
    %c2 = arith.constant 2 : index
    %c0_29 = arith.constant 0 : index
    %70 = vector.load %arg3[%c2, %c0_29] : memref<16x256xf32, #tpu.memory_space<vmem>>, vector<1x128xf32>
    %c8 = arith.constant 8 : index
    %c0_30 = arith.constant 0 : index
    %71 = vector.load %arg3[%c8, %c0_30] : memref<16x256xf32, #tpu.memory_space<vmem>>, vector<1x128xf32>
    %cst_31 = arith.constant dense<0.000000e+00> : vector<128xf32>
    %72 = vector.multi_reduction <add>, %69, %cst_31 [0] : vector<8x128xf32> to vector<128xf32>
    %73 = vector.shape_cast %72 : vector<128xf32> to vector<1x128xf32>
    %cst_32 = arith.constant 1.250000e-01 : f32
    %74 = vector.broadcast %cst_32 : f32 to vector<1x128xf32>
    %75 = arith.mulf %73, %74 : vector<1x128xf32>
    %76 = arith.mulf %69, %69 : vector<8x128xf32>
    %cst_33 = arith.constant dense<0.000000e+00> : vector<128xf32>
    %77 = vector.multi_reduction <add>, %76, %cst_33 [0] : vector<8x128xf32> to vector<128xf32>
    %78 = vector.shape_cast %77 : vector<128xf32> to vector<1x128xf32>
    %cst_34 = arith.constant 1.250000e-01 : f32
    %79 = vector.broadcast %cst_34 : f32 to vector<1x128xf32>
    %80 = arith.mulf %78, %79 : vector<1x128xf32>
    %81 = arith.mulf %75, %75 : vector<1x128xf32>
    %82 = arith.subf %80, %81 : vector<1x128xf32>
    %cst_35 = arith.constant 0.000000e+00 : f32
    %83 = vector.broadcast %cst_35 : f32 to vector<1x128xf32>
    %84 = arith.maximumf %82, %83 : vector<1x128xf32>
    %cst_36 = arith.constant 9.99999974E-6 : f32
    %85 = vector.broadcast %cst_36 : f32 to vector<1x128xf32>
    %86 = arith.addf %84, %85 : vector<1x128xf32>
    %87 = math.rsqrt %86 : vector<1x128xf32>
    %88 = arith.mulf %70, %87 : vector<1x128xf32>
    %89 = arith.mulf %75, %88 : vector<1x128xf32>
    %90 = arith.subf %71, %89 : vector<1x128xf32>
    %91 = vector.broadcast %88 : vector<1x128xf32> to vector<8x128xf32>
    %92 = arith.mulf %69, %91 : vector<8x128xf32>
    %93 = vector.broadcast %90 : vector<1x128xf32> to vector<8x128xf32>
    %94 = arith.addf %92, %93 : vector<8x128xf32>
    %cst_37 = arith.constant 0.000000e+00 : f32
    %95 = vector.broadcast %cst_37 : f32 to vector<8x128xf32>
    %96 = arith.cmpf oge, %94, %95 : vector<8x128xf32>
    %cst_38 = arith.constant 0.00999999977 : f32
    %97 = vector.broadcast %cst_38 : f32 to vector<8x128xf32>
    %98 = arith.mulf %97, %94 : vector<8x128xf32>
    %99 = arith.select %96, %94, %98 : vector<8x128xi1>, vector<8x128xf32>
    %c384 = arith.constant 384 : index
    %c0_39 = arith.constant 0 : index
    %100 = vector.load %arg2[%c384, %c0_39] : memref<768x128xbf16, #tpu.memory_space<vmem>>, vector<128x128xbf16>
    %101 = arith.truncf %99 : vector<8x128xf32> to vector<8x128xbf16>
    %cst_40 = arith.constant dense<0.000000e+00> : vector<8x128xf32>
    %102 = tpu.matmul %101, %100, %cst_40 {dimension_numbers = #tpu.dot_dimension_numbers<[1], [0], [0], [1], [0, 0, 1, 1], [], []>} : vector<8x128xbf16>, vector<128x128xbf16>, vector<8x128xf32> -> vector<8x128xf32>
    %c3 = arith.constant 3 : index
    %c0_41 = arith.constant 0 : index
    %103 = vector.load %arg3[%c3, %c0_41] : memref<16x256xf32, #tpu.memory_space<vmem>>, vector<1x128xf32>
    %c9 = arith.constant 9 : index
    %c0_42 = arith.constant 0 : index
    %104 = vector.load %arg3[%c9, %c0_42] : memref<16x256xf32, #tpu.memory_space<vmem>>, vector<1x128xf32>
    %cst_43 = arith.constant dense<0.000000e+00> : vector<128xf32>
    %105 = vector.multi_reduction <add>, %102, %cst_43 [0] : vector<8x128xf32> to vector<128xf32>
    %106 = vector.shape_cast %105 : vector<128xf32> to vector<1x128xf32>
    %cst_44 = arith.constant 1.250000e-01 : f32
    %107 = vector.broadcast %cst_44 : f32 to vector<1x128xf32>
    %108 = arith.mulf %106, %107 : vector<1x128xf32>
    %109 = arith.mulf %102, %102 : vector<8x128xf32>
    %cst_45 = arith.constant dense<0.000000e+00> : vector<128xf32>
    %110 = vector.multi_reduction <add>, %109, %cst_45 [0] : vector<8x128xf32> to vector<128xf32>
    %111 = vector.shape_cast %110 : vector<128xf32> to vector<1x128xf32>
    %cst_46 = arith.constant 1.250000e-01 : f32
    %112 = vector.broadcast %cst_46 : f32 to vector<1x128xf32>
    %113 = arith.mulf %111, %112 : vector<1x128xf32>
    %114 = arith.mulf %108, %108 : vector<1x128xf32>
    %115 = arith.subf %113, %114 : vector<1x128xf32>
    %cst_47 = arith.constant 0.000000e+00 : f32
    %116 = vector.broadcast %cst_47 : f32 to vector<1x128xf32>
    %117 = arith.maximumf %115, %116 : vector<1x128xf32>
    %cst_48 = arith.constant 9.99999974E-6 : f32
    %118 = vector.broadcast %cst_48 : f32 to vector<1x128xf32>
    %119 = arith.addf %117, %118 : vector<1x128xf32>
    %120 = math.rsqrt %119 : vector<1x128xf32>
    %121 = arith.mulf %103, %120 : vector<1x128xf32>
    %122 = arith.mulf %108, %121 : vector<1x128xf32>
    %123 = arith.subf %104, %122 : vector<1x128xf32>
    %124 = vector.broadcast %121 : vector<1x128xf32> to vector<8x128xf32>
    %125 = arith.mulf %102, %124 : vector<8x128xf32>
    %126 = vector.broadcast %123 : vector<1x128xf32> to vector<8x128xf32>
    %127 = arith.addf %125, %126 : vector<8x128xf32>
    %cst_49 = arith.constant 0.000000e+00 : f32
    %128 = vector.broadcast %cst_49 : f32 to vector<8x128xf32>
    %129 = arith.cmpf oge, %127, %128 : vector<8x128xf32>
    %cst_50 = arith.constant 0.00999999977 : f32
    %130 = vector.broadcast %cst_50 : f32 to vector<8x128xf32>
    %131 = arith.mulf %130, %127 : vector<8x128xf32>
    %132 = arith.select %129, %127, %131 : vector<8x128xi1>, vector<8x128xf32>
    %c512 = arith.constant 512 : index
    %c0_51 = arith.constant 0 : index
    %133 = vector.load %arg2[%c512, %c0_51] : memref<768x128xbf16, #tpu.memory_space<vmem>>, vector<128x128xbf16>
    %134 = arith.truncf %132 : vector<8x128xf32> to vector<8x128xbf16>
    %cst_52 = arith.constant dense<0.000000e+00> : vector<8x128xf32>
    %135 = tpu.matmul %134, %133, %cst_52 {dimension_numbers = #tpu.dot_dimension_numbers<[1], [0], [0], [1], [0, 0, 1, 1], [], []>} : vector<8x128xbf16>, vector<128x128xbf16>, vector<8x128xf32> -> vector<8x128xf32>
    %c4 = arith.constant 4 : index
    %c0_53 = arith.constant 0 : index
    %136 = vector.load %arg3[%c4, %c0_53] : memref<16x256xf32, #tpu.memory_space<vmem>>, vector<1x128xf32>
    %c10 = arith.constant 10 : index
    %c0_54 = arith.constant 0 : index
    %137 = vector.load %arg3[%c10, %c0_54] : memref<16x256xf32, #tpu.memory_space<vmem>>, vector<1x128xf32>
    %cst_55 = arith.constant dense<0.000000e+00> : vector<128xf32>
    %138 = vector.multi_reduction <add>, %135, %cst_55 [0] : vector<8x128xf32> to vector<128xf32>
    %139 = vector.shape_cast %138 : vector<128xf32> to vector<1x128xf32>
    %cst_56 = arith.constant 1.250000e-01 : f32
    %140 = vector.broadcast %cst_56 : f32 to vector<1x128xf32>
    %141 = arith.mulf %139, %140 : vector<1x128xf32>
    %142 = arith.mulf %135, %135 : vector<8x128xf32>
    %cst_57 = arith.constant dense<0.000000e+00> : vector<128xf32>
    %143 = vector.multi_reduction <add>, %142, %cst_57 [0] : vector<8x128xf32> to vector<128xf32>
    %144 = vector.shape_cast %143 : vector<128xf32> to vector<1x128xf32>
    %cst_58 = arith.constant 1.250000e-01 : f32
    %145 = vector.broadcast %cst_58 : f32 to vector<1x128xf32>
    %146 = arith.mulf %144, %145 : vector<1x128xf32>
    %147 = arith.mulf %141, %141 : vector<1x128xf32>
    %148 = arith.subf %146, %147 : vector<1x128xf32>
    %cst_59 = arith.constant 0.000000e+00 : f32
    %149 = vector.broadcast %cst_59 : f32 to vector<1x128xf32>
    %150 = arith.maximumf %148, %149 : vector<1x128xf32>
    %cst_60 = arith.constant 9.99999974E-6 : f32
    %151 = vector.broadcast %cst_60 : f32 to vector<1x128xf32>
    %152 = arith.addf %150, %151 : vector<1x128xf32>
    %153 = math.rsqrt %152 : vector<1x128xf32>
    %154 = arith.mulf %136, %153 : vector<1x128xf32>
    %155 = arith.mulf %141, %154 : vector<1x128xf32>
    %156 = arith.subf %137, %155 : vector<1x128xf32>
    %157 = vector.broadcast %154 : vector<1x128xf32> to vector<8x128xf32>
    %158 = arith.mulf %135, %157 : vector<8x128xf32>
    %159 = vector.broadcast %156 : vector<1x128xf32> to vector<8x128xf32>
    %160 = arith.addf %158, %159 : vector<8x128xf32>
    %cst_61 = arith.constant 0.000000e+00 : f32
    %161 = vector.broadcast %cst_61 : f32 to vector<8x128xf32>
    %162 = arith.cmpf oge, %160, %161 : vector<8x128xf32>
    %cst_62 = arith.constant 0.00999999977 : f32
    %163 = vector.broadcast %cst_62 : f32 to vector<8x128xf32>
    %164 = arith.mulf %163, %160 : vector<8x128xf32>
    %165 = arith.select %162, %160, %164 : vector<8x128xi1>, vector<8x128xf32>
    %c640 = arith.constant 640 : index
    %c0_63 = arith.constant 0 : index
    %166 = vector.load %arg2[%c640, %c0_63] : memref<768x128xbf16, #tpu.memory_space<vmem>>, vector<128x128xbf16>
    %167 = arith.truncf %165 : vector<8x128xf32> to vector<8x128xbf16>
    %cst_64 = arith.constant dense<0.000000e+00> : vector<8x128xf32>
    %168 = tpu.matmul %167, %166, %cst_64 {dimension_numbers = #tpu.dot_dimension_numbers<[1], [0], [0], [1], [0, 0, 1, 1], [], []>} : vector<8x128xbf16>, vector<128x128xbf16>, vector<8x128xf32> -> vector<8x128xf32>
    %c5 = arith.constant 5 : index
    %c0_65 = arith.constant 0 : index
    %169 = vector.load %arg3[%c5, %c0_65] : memref<16x256xf32, #tpu.memory_space<vmem>>, vector<1x128xf32>
    %c11 = arith.constant 11 : index
    %c0_66 = arith.constant 0 : index
    %170 = vector.load %arg3[%c11, %c0_66] : memref<16x256xf32, #tpu.memory_space<vmem>>, vector<1x128xf32>
    %cst_67 = arith.constant dense<0.000000e+00> : vector<128xf32>
    %171 = vector.multi_reduction <add>, %168, %cst_67 [0] : vector<8x128xf32> to vector<128xf32>
    %172 = vector.shape_cast %171 : vector<128xf32> to vector<1x128xf32>
    %cst_68 = arith.constant 1.250000e-01 : f32
    %173 = vector.broadcast %cst_68 : f32 to vector<1x128xf32>
    %174 = arith.mulf %172, %173 : vector<1x128xf32>
    %175 = arith.mulf %168, %168 : vector<8x128xf32>
    %cst_69 = arith.constant dense<0.000000e+00> : vector<128xf32>
    %176 = vector.multi_reduction <add>, %175, %cst_69 [0] : vector<8x128xf32> to vector<128xf32>
    %177 = vector.shape_cast %176 : vector<128xf32> to vector<1x128xf32>
    %cst_70 = arith.constant 1.250000e-01 : f32
    %178 = vector.broadcast %cst_70 : f32 to vector<1x128xf32>
    %179 = arith.mulf %177, %178 : vector<1x128xf32>
    %180 = arith.mulf %174, %174 : vector<1x128xf32>
    %181 = arith.subf %179, %180 : vector<1x128xf32>
    %cst_71 = arith.constant 0.000000e+00 : f32
    %182 = vector.broadcast %cst_71 : f32 to vector<1x128xf32>
    %183 = arith.maximumf %181, %182 : vector<1x128xf32>
    %cst_72 = arith.constant 9.99999974E-6 : f32
    %184 = vector.broadcast %cst_72 : f32 to vector<1x128xf32>
    %185 = arith.addf %183, %184 : vector<1x128xf32>
    %186 = math.rsqrt %185 : vector<1x128xf32>
    %187 = arith.mulf %169, %186 : vector<1x128xf32>
    %188 = arith.mulf %174, %187 : vector<1x128xf32>
    %189 = arith.subf %170, %188 : vector<1x128xf32>
    %190 = vector.broadcast %187 : vector<1x128xf32> to vector<8x128xf32>
    %191 = arith.mulf %168, %190 : vector<8x128xf32>
    %192 = vector.broadcast %189 : vector<1x128xf32> to vector<8x128xf32>
    %193 = arith.addf %191, %192 : vector<8x128xf32>
    %cst_73 = arith.constant 0.000000e+00 : f32
    %194 = vector.broadcast %cst_73 : f32 to vector<8x128xf32>
    %195 = arith.cmpf oge, %193, %194 : vector<8x128xf32>
    %cst_74 = arith.constant 0.00999999977 : f32
    %196 = vector.broadcast %cst_74 : f32 to vector<8x128xf32>
    %197 = arith.mulf %196, %193 : vector<8x128xf32>
    %198 = arith.select %195, %193, %197 : vector<8x128xi1>, vector<8x128xf32>
    %c12 = arith.constant 12 : index
    %c0_75 = arith.constant 0 : index
    %199 = vector.load %arg3[%c12, %c0_75] : memref<16x256xf32, #tpu.memory_space<vmem>>, vector<1x128xf32>
    %c13 = arith.constant 13 : index
    %c0_76 = arith.constant 0 : index
    %200 = vector.load %arg3[%c13, %c0_76] : memref<16x256xf32, #tpu.memory_space<vmem>>, vector<1x128xf32>
    %201 = vector.broadcast %199 : vector<1x128xf32> to vector<8x128xf32>
    %202 = arith.mulf %198, %201 : vector<8x128xf32>
    %cst_77 = arith.constant dense<0.000000e+00> : vector<8xf32>
    %203 = vector.multi_reduction <add>, %202, %cst_77 [1] : vector<8x128xf32> to vector<8xf32>
    %204 = vector.shape_cast %203 : vector<8xf32> to vector<8x1xf32>
    %205 = vector.broadcast %204 : vector<8x1xf32> to vector<8x128xf32>
    %206 = vector.broadcast %200 : vector<1x128xf32> to vector<8x128xf32>
    %207 = arith.addf %205, %206 : vector<8x128xf32>
    %c0_78 = arith.constant 0 : index
    %c0_79 = arith.constant 0 : index
    %208 = vector.load %arg4[%c0_78, %c0_79] : memref<8x128xf32, #tpu.memory_space<vmem>>, vector<8x128xf32>
    tpu.vector_store %arg4[%c0_78, %c0_79], %207 {strides = array<i32>} : memref<8x128xf32, #tpu.memory_space<vmem>>, vector<8x128xf32>,
    return
  }
}

</mosaic_0001>

<llo_original>
// kernel: mynet_forward.1
$region0: #{mynet_forward.1}
  #allocation0 [shape = 'u32[]', space=smem, size = 0x4, offset = 0x4, fixed_abs, tag = 'smem constant byte address 0x4 - core index']
  #allocation1 [shape = 'u32[72,128]{1,0:T(1,128)}', space=vmem, size = 0x9000, scoped, tag = 'internal scratch']
  %s0 = inlined_call_operand.hbm [shape: f32[8,32], index: 0, kind: input, shape index: {}]
  %s1 = inlined_call_operand.hbm [shape: bf16[32,256], index: 1, kind: input, shape index: {}]
  %s2 = inlined_call_operand.hbm [shape: bf16[768,128], index: 2, kind: input, shape index: {}]
  %s3 = inlined_call_operand.hbm [shape: f32[16,256], index: 3, kind: input, shape index: {}]
  %s4 = inlined_call_operand.vmem [shape: f32[8,128], index: 4, kind: output, shape index: {}]
  %s5 = sld [smem:[#allocation0]]
  $region42: #{mynet_forward.1} parent=0
    _
  %s7 = ssub.s32 1, %s5
  %s8 = scalar_select 0, %s7, %s5
  $region1: #{mynet_forward.1} parent=0
    #allocation2 [shape = 'u8[4096]{0}', space=vmem, size = 0x1000, scoped, tag = 'input window, operand 0, single buffered']
    #allocation3 [shape = 's32[1]{0}', space=sflag, size = 0x4, scoped, tag = 'scoped memory for mynet_forward.1']
    #allocation4 [shape = 'u8[16384]{0}', space=vmem, size = 0x4000, scoped, tag = 'input window, operand 1, single buffered']
    #allocation5 [shape = 's32[1]{0}', space=sflag, size = 0x4, scoped, tag = 'scoped memory for mynet_forward.1']
    #allocation6 [shape = 'u8[196608]{0}', space=vmem, size = 0x30000, scoped, tag = 'input window, operand 2, single buffered']
    #allocation7 [shape = 'u8[16384]{0}', space=vmem, size = 0x4000, scoped, tag = 'input window, operand 3, single buffered']
    #allocation8 [shape = 's32[1]{0}', space=sflag, size = 0x4, scoped, tag = 'scoped memory for mynet_forward.1']
    %9 = vsyncpa [#allocation3], 0
    %10 = vsyncpa [#allocation5], 0
    %11 = vsyncpa [#allocation8], 0
    // Predicated region
    $region2: #{mynet_forward.1} parent=1 // pred_check
      _
    $region3: #{mynet_forward.1} parent=1 // pred_check_branch
      %13 = sbr.rel (0) target = $region5
    $region4: #{mynet_forward.1} parent=1 // pred_region
      %15 = vsyncadd [#allocation3], 0
      %s17 = sshll.u32 %s0, 4
      %s18 = int_to_ptr.hbm [resolvable:$true] %s17
      %s19 = sshll.u32 [#allocation2], 4
      %s20 = int_to_ptr.vmem [resolvable:$true] %s19
      %22 = dma.hbm_to_vmem [thread:$0]  %s18, 128, %s20, [#allocation3]
    $region5: #{mynet_forward.1} parent=1 // pred_fallthru
      _
    // Predicated region
    $region6: #{mynet_forward.1} parent=1 // pred_check
      _
    $region7: #{mynet_forward.1} parent=1 // pred_check_branch
      %24 = sbr.rel (0) target = $region9
    $region8: #{mynet_forward.1} parent=1 // pred_region
      %26 = vsyncadd [#allocation5], 0
      %s27 = sshll.u32 %s1, 4
      %s28 = int_to_ptr.hbm [resolvable:$true] %s27
      %s29 = sshll.u32 [#allocation4], 4
      %s30 = int_to_ptr.vmem [resolvable:$true] %s29
      %35 = dma.hbm_to_vmem [thread:$0]  %s28, 512, %s30, [#allocation5], 128, 128, 8
    $region9: #{mynet_forward.1} parent=1 // pred_fallthru
      _
    // Predicated region
    $region10: #{mynet_forward.1} parent=1 // pred_check
      _
    $region11: #{mynet_forward.1} parent=1 // pred_check_branch
      %37 = sbr.rel (0) target = $region13
    $region12: #{mynet_forward.1} parent=1 // pred_region
      %39 = vsyncadd [#allocation5], 0
      %s40 = sshll.u32 %s2, 4
      %s41 = int_to_ptr.hbm [resolvable:$true] %s40
      %s42 = sshll.u32 [#allocation6], 4
      %s43 = int_to_ptr.vmem [resolvable:$true] %s42
      %48 = dma.hbm_to_vmem [thread:$0]  %s41, 6144, %s43, [#allocation5], 64, 64, 4
    $region13: #{mynet_forward.1} parent=1 // pred_fallthru
      _
    // Predicated region
    $region14: #{mynet_forward.1} parent=1 // pred_check
      _
    $region15: #{mynet_forward.1} parent=1 // pred_check_branch
      %50 = sbr.rel (0) target = $region17
    $region16: #{mynet_forward.1} parent=1 // pred_region
      %52 = vsyncadd [#allocation8], 0
      %s53 = sshll.u32 %s3, 4
      %s54 = int_to_ptr.hbm [resolvable:$true] %s53
      %s55 = sshll.u32 [#allocation7], 4
      %s56 = int_to_ptr.vmem [resolvable:$true] %s55
      %61 = dma.hbm_to_vmem [thread:$0]  %s54, 512, %s56, [#allocation8], 256, 256, 16
    $region17: #{mynet_forward.1} parent=1 // pred_fallthru
      _
    // Predicated region
    $region18: #{mynet_forward.1} parent=1 // pred_check
      _
    $region19: #{mynet_forward.1} parent=1 // pred_check_branch
      %63 = sbr.rel (0) target = $region21
    $region20: #{mynet_forward.1} parent=1 // pred_region
      %65 = dma.done [#allocation3], 128
    $region21: #{mynet_forward.1} parent=1 // pred_fallthru
      _
    // Predicated region
    $region22: #{mynet_forward.1} parent=1 // pred_check
      _
    $region23: #{mynet_forward.1} parent=1 // pred_check_branch
      %67 = sbr.rel (0) target = $region25
    $region24: #{mynet_forward.1} parent=1 // pred_region
      %69 = dma.done [#allocation5], 512
    $region25: #{mynet_forward.1} parent=1 // pred_fallthru
      _
    // Predicated region
    $region26: #{mynet_forward.1} parent=1 // pred_check
      _
    $region27: #{mynet_forward.1} parent=1 // pred_check_branch
      %71 = sbr.rel (0) target = $region29
    $region28: #{mynet_forward.1} parent=1 // pred_region
      %73 = dma.done [#allocation5], 6144
    $region29: #{mynet_forward.1} parent=1 // pred_fallthru
      _
    // Predicated region
    $region30: #{mynet_forward.1} parent=1 // pred_check
      _
    $region31: #{mynet_forward.1} parent=1 // pred_check_branch
      %75 = sbr.rel (0) target = $region33
    $region32: #{mynet_forward.1} parent=1 // pred_region
      %77 = dma.done [#allocation8], 512
    $region33: #{mynet_forward.1} parent=1 // pred_fallthru
      _
    %v79 = vld [vmem:[#allocation2] sm:$0xff]
    %v80 = vpack.c.bf16 %v79, %v79
    %v81 = vld [vmem:[#allocation4] sm:$0xff]
    %v82 = vld [vmem:[#allocation4 + $0x8] sm:$0xff]
    %v83 = vld [vmem:[#allocation4 + $0x10] sm:$0xff]
    %v84 = vld [vmem:[#allocation4 + $0x18] sm:$0xff]
    %v89 = vunpack.c.l.b16 %v81
    %v90 = vunpack.c.h.b16 %v81
    %v91 = vunpack.c.l.b16 %v82
    %v92 = vunpack.c.h.b16 %v82
    %v93 = vunpack.c.l.b16 %v83
    %v94 = vunpack.c.h.b16 %v83
    %v95 = vunpack.c.l.b16 %v84
    %v96 = vunpack.c.h.b16 %v84
    %v97 = vpack.c.b16 %v91, %v89
    %v98 = vpack.c.b16 %v92, %v90
    %v99 = vpack.c.b16 %v95, %v93
    %v100 = vpack.c.b16 %v96, %v94
    %vm105 = vcmask 261120
    %v107 = vsel %vm105, %v80, 0
    %109 = vmatpush.bf16.msra.mxu0 0
    %110 = vmatpush.bf16.msra.mxu0 0
    %111 = vmatpush.bf16.msra.mxu0 0
    %112 = vmatpush.bf16.msra.mxu0 0
    %113 = vmatpush.bf16.msra.mxu0 0
    %114 = vmatpush.bf16.msra.mxu0 0
    %115 = vmatpush.bf16.msra.mxu0 %v99
    %116 = vmatpush.bf16.msra.mxu0 %v97
    %117 = vmatmul.bf16.gmra.mxu0 %v107
    %v118 = vpop.f32.mrf.mxu0
    %v119 = vadd.f32 0.0, %v118
    %v120 = vpop.f32.mrf.mxu0
    %121 = vdwg.mxu0
    %122 = vmatpush.bf16.msra.mxu0 0
    %123 = vmatpush.bf16.msra.mxu0 0
    %124 = vmatpush.bf16.msra.mxu0 0
    %125 = vmatpush.bf16.msra.mxu0 0
    %126 = vmatpush.bf16.msra.mxu0 0
    %127 = vmatpush.bf16.msra.mxu0 0
    %128 = vmatpush.bf16.msra.mxu0 %v100
    %129 = vmatpush.bf16.msra.mxu0 %v98
    %130 = vmatmul.bf16.gmra.mxu0 %v107
    %v131 = vpop.f32.mrf.mxu0
    %v132 = vadd.f32 0.0, %v131
    %v133 = vpop.f32.mrf.mxu0
    %134 = vdwg.mxu0
    %v135 = vld [vmem:[#allocation7] ss:$8 sm:$0x3]
    %s136 = scalar_lea.vmem [#allocation7], 6
    %v137 = vld [vmem:[%s136] ss:$8 sm:$0x3]
    %v138 = vrot.slane %v119, 4
    %v139 = vadd.f32 %v119, %v138
    %v140 = vrot.slane %v139, 2
    %v141 = vadd.f32 %v139, %v140
    %v142 = vrot.slane %v141, 1
    %v143 = vadd.f32 %v141, %v142
    %v144 = vrot.slane %v132, 4
    %v145 = vadd.f32 %v132, %v144
    %v146 = vrot.slane %v145, 2
    %v147 = vadd.f32 %v145, %v146
    %v148 = vrot.slane %v147, 1
    %v149 = vadd.f32 %v147, %v148
    %v150 = vmul.f32 %v143, 0.125
    %v151 = vmul.f32 %v149, 0.125
    %v152 = vmul.f32 %v119, %v119
    %v153 = vmul.f32 %v132, %v132
    %v154 = vrot.slane %v152, 4
    %v155 = vadd.f32 %v152, %v154
    %v156 = vrot.slane %v155, 2
    %v157 = vadd.f32 %v155, %v156
    %v158 = vrot.slane %v157, 1
    %v159 = vadd.f32 %v157, %v158
    %v160 = vrot.slane %v153, 4
    %v161 = vadd.f32 %v153, %v160
    %v162 = vrot.slane %v161, 2
    %v163 = vadd.f32 %v161, %v162
    %v164 = vrot.slane %v163, 1
    %v165 = vadd.f32 %v163, %v164
    %v166 = vmul.f32 %v159, 0.125
    %v167 = vmul.f32 %v165, 0.125
    %v168 = vmul.f32 %v150, %v150
    %v169 = vmul.f32 %v151, %v151
    %v170 = vsub.f32 %v166, %v168
    %v171 = vsub.f32 %v167, %v169
    %v172 = vmax.f32 %v170, 0.0
    %v173 = vmax.f32 %v171, 0.0
    %v174 = vadd.f32 %v172, 1e-05
    %v175 = vadd.f32 %v173, 1e-05
    %v176 = vrsqrt.pop %v174
    %v177 = vmul.f32 %v176, %v174
    %v178 = vmul.f32 %v177, %v176
    %v179 = vmul.f32 0.5, %v178
    %v180 = vsub.f32 1.5, %v179
    %v181 = vmul.f32 %v176, %v180
    %vm182 = vweird.f32 %v174
    %vm183 = vweird.f32 %v176
    %vm184 = vmor %vm182, %vm183
    %v185 = vsel %vm184, %v176, %v181
    %v186 = vrsqrt.pop %v175
    %v187 = vmul.f32 %v186, %v175
    %v188 = vmul.f32 %v187, %v186
    %v189 = vmul.f32 0.5, %v188
    %v190 = vsub.f32 1.5, %v189
    %v191 = vmul.f32 %v186, %v190
    %vm192 = vweird.f32 %v175
    %vm193 = vweird.f32 %v186
    %vm194 = vmor %vm192, %vm193
    %v195 = vsel %vm194, %v186, %v191
    %v198 = vrot.slane %v195, 7
    %vm199 = vcmask 1040384
    %v200 = vsel %vm199, %v185, %v198
    %v202 = vmul.f32 %v135, %v200
    %v204 = vperm.slane %v202, 0
    %v205 = vperm.slane %v202, 1
    %v208 = vmul.f32 %v150, %v204
    %v209 = vmul.f32 %v151, %v205
    %v212 = vrot.slane %v209, 7
    %v213 = vsel %vm199, %v208, %v212
    %v215 = vsub.f32 %v137, %v213
    %v216 = vmul.f32 %v119, %v204
    %v217 = vmul.f32 %v132, %v205
    %v219 = vperm.slane %v215, 0
    %v220 = vperm.slane %v215, 1
    %v223 = vadd.f32 %v216, %v219
    %v224 = vadd.f32 %v217, %v220
    %vm225 = vcmp.ge.f32.partialorder %v223, 0.0
    %vm226 = vcmp.ge.f32.partialorder %v224, 0.0
    %v227 = vmul.f32 %v223, 0.01
    %v228 = vmul.f32 %v224, 0.01
    %v229 = vsel %vm225, %v223, %v227
    %v230 = vsel %vm226, %v224, %v228
    %v231 = vld [vmem:[#allocation6] sm:$0xf]
    %v232 = vld [vmem:[#allocation6 + $0x4] sm:$0xf]
    %v233 = vld [vmem:[#allocation6 + $0x8] sm:$0xf]
    %v234 = vld [vmem:[#allocation6 + $0xc] sm:$0xf]
    %v235 = vld [vmem:[#allocation6 + $0x10] sm:$0xf]
    %v236 = vld [vmem:[#allocation6 + $0x14] sm:$0xf]
    %v237 = vld [vmem:[#allocation6 + $0x18] sm:$0xf]
    %v238 = vld [vmem:[#allocation6 + $0x1c] sm:$0xf]
    %v239 = vld [vmem:[#allocation6 + $0x20] sm:$0xf]
    %v240 = vld [vmem:[#allocation6 + $0x24] sm:$0xf]
    %v241 = vld [vmem:[#allocation6 + $0x28] sm:$0xf]
    %v242 = vld [vmem:[#allocation6 + $0x2c] sm:$0xf]
    %v243 = vld [vmem:[#allocation6 + $0x30] sm:$0xf]
    %v244 = vld [vmem:[#allocation6 + $0x34] sm:$0xf]
    %v245 = vld [vmem:[#allocation6 + $0x38] sm:$0xf]
    %v246 = vld [vmem:[#allocation6 + $0x3c] sm:$0xf]
    %v247 = vld [vmem:[#allocation6 + $0x40] sm:$0xf]
    %v248 = vld [vmem:[#allocation6 + $0x44] sm:$0xf]
    %v249 = vld [vmem:[#allocation6 + $0x48] sm:$0xf]
    %v250 = vld [vmem:[#allocation6 + $0x4c] sm:$0xf]
    %v251 = vld [vmem:[#allocation6 + $0x50] sm:$0xf]
    %v252 = vld [vmem:[#allocation6 + $0x54] sm:$0xf]
    %v253 = vld [vmem:[#allocation6 + $0x58] sm:$0xf]
    %v254 = vld [vmem:[#allocation6 + $0x5c] sm:$0xf]
    %v255 = vld [vmem:[#allocation6 + $0x60] sm:$0xf]
    %v256 = vld [vmem:[#allocation6 + $0x64] sm:$0xf]
    %v257 = vld [vmem:[#allocation6 + $0x68] sm:$0xf]
    %v258 = vld [vmem:[#allocation6 + $0x6c] sm:$0xf]
    %v259 = vld [vmem:[#allocation6 + $0x70] sm:$0xf]
    %v260 = vld [vmem:[#allocation6 + $0x74] sm:$0xf]
    %v261 = vld [vmem:[#allocation6 + $0x78] sm:$0xf]
    %v262 = vld [vmem:[#allocation6 + $0x7c] sm:$0xf]
    %v263 = vpack.c.bf16 %v229, %v229
    %v264 = vpack.c.bf16 %v230, %v230
    %v297 = vunpack.c.l.b16 %v231
    %v298 = vunpack.c.l.b16 %v232
    %v299 = vunpack.c.l.b16 %v233
    %v300 = vunpack.c.l.b16 %v234
    %v301 = vunpack.c.l.b16 %v235
    %v302 = vunpack.c.l.b16 %v236
    %v303 = vunpack.c.l.b16 %v237
    %v304 = vunpack.c.l.b16 %v238
    %v305 = vunpack.c.l.b16 %v239
    %v306 = vunpack.c.l.b16 %v240
    %v307 = vunpack.c.l.b16 %v241
    %v308 = vunpack.c.l.b16 %v242
    %v309 = vunpack.c.l.b16 %v243
    %v310 = vunpack.c.l.b16 %v244
    %v311 = vunpack.c.l.b16 %v245
    %v312 = vunpack.c.l.b16 %v246
    %v313 = vunpack.c.l.b16 %v247
    %v314 = vunpack.c.l.b16 %v248
    %v315 = vunpack.c.l.b16 %v249
    %v316 = vunpack.c.l.b16 %v250
    %v317 = vunpack.c.l.b16 %v251
    %v318 = vunpack.c.l.b16 %v252
    %v319 = vunpack.c.l.b16 %v253
    %v320 = vunpack.c.l.b16 %v254
    %v321 = vunpack.c.l.b16 %v255
    %v322 = vunpack.c.l.b16 %v256
    %v323 = vunpack.c.l.b16 %v257
    %v324 = vunpack.c.l.b16 %v258
    %v325 = vunpack.c.l.b16 %v259
    %v326 = vunpack.c.l.b16 %v260
    %v327 = vunpack.c.l.b16 %v261
    %v328 = vunpack.c.l.b16 %v262
    %v329 = vpack.c.b16 %v298, %v297
    %v330 = vpack.c.b16 %v300, %v299
    %v331 = vpack.c.b16 %v302, %v301
    %v332 = vpack.c.b16 %v304, %v303
    %v333 = vpack.c.b16 %v306, %v305
    %v334 = vpack.c.b16 %v308, %v307
    %v335 = vpack.c.b16 %v310, %v309
    %v336 = vpack.c.b16 %v312, %v311
    %v337 = vpack.c.b16 %v314, %v313
    %v338 = vpack.c.b16 %v316, %v315
    %v339 = vpack.c.b16 %v318, %v317
    %v340 = vpack.c.b16 %v320, %v319
    %v341 = vpack.c.b16 %v322, %v321
    %v342 = vpack.c.b16 %v324, %v323
    %v343 = vpack.c.b16 %v326, %v325
    %v344 = vpack.c.b16 %v328, %v327
    %361 = vmatpush.bf16.msra.mxu0 %v336
    %362 = vmatpush.bf16.msra.mxu0 %v335
    %363 = vmatpush.bf16.msra.mxu0 %v334
    %364 = vmatpush.bf16.msra.mxu0 %v333
    %365 = vmatpush.bf16.msra.mxu0 %v332
    %366 = vmatpush.bf16.msra.mxu0 %v331
    %367 = vmatpush.bf16.msra.mxu0 %v330
    %368 = vmatpush.bf16.msra.mxu0 %v329
    %369 = vmatmul.bf16.gmra.mxu0 %v263
    %v370 = vpop.f32.mrf.mxu0
    %v371 = vadd.f32 0.0, %v370
    %v372 = vpop.f32.mrf.mxu0
    %373 = vdwg.mxu0
    %374 = vmatpush.bf16.msra.mxu0 %v344
    %375 = vmatpush.bf16.msra.mxu0 %v343
    %376 = vmatpush.bf16.msra.mxu0 %v342
    %377 = vmatpush.bf16.msra.mxu0 %v341
    %378 = vmatpush.bf16.msra.mxu0 %v340
    %379 = vmatpush.bf16.msra.mxu0 %v339
    %380 = vmatpush.bf16.msra.mxu0 %v338
    %381 = vmatpush.bf16.msra.mxu0 %v337
    %382 = vmatmul.bf16.gmra.mxu0 %v264
    %v383 = vpop.f32.mrf.mxu0
    %v384 = vadd.f32 %v371, %v383
    %v385 = vpop.f32.mrf.mxu0
    %386 = vdwg.mxu0
    %v387 = vld [vmem:[#allocation7 + $0x1] ss:$0 sm:$0xff]
    %v388 = vld [vmem:[#allocation7 + $0x7] ss:$0 sm:$0xff]
    %v389 = vrot.slane %v384, 4
    %v390 = vadd.f32 %v384, %v389
    %v391 = vrot.slane %v390, 2
    %v392 = vadd.f32 %v390, %v391
    %v393 = vrot.slane %v392, 1
    %v394 = vadd.f32 %v392, %v393
    %v395 = vmul.f32 %v394, 0.125
    %v396 = vmul.f32 %v384, %v384
    %v397 = vrot.slane %v396, 4
    %v398 = vadd.f32 %v396, %v397
    %v399 = vrot.slane %v398, 2
    %v400 = vadd.f32 %v398, %v399
    %v401 = vrot.slane %v400, 1
    %v402 = vadd.f32 %v400, %v401
    %v403 = vmul.f32 %v402, 0.125
    %v404 = vmul.f32 %v395, %v395
    %v405 = vsub.f32 %v403, %v404
    %v406 = vmax.f32 %v405, 0.0
    %v407 = vadd.f32 %v406, 1e-05
    %v408 = vrsqrt.pop %v407
    %v409 = vmul.f32 %v408, %v407
    %v410 = vmul.f32 %v409, %v408
    %v411 = vmul.f32 0.5, %v410
    %v412 = vsub.f32 1.5, %v411
    %v413 = vmul.f32 %v408, %v412
    %vm414 = vweird.f32 %v407
    %vm415 = vweird.f32 %v408
    %vm416 = vmor %vm414, %vm415
    %v417 = vsel %vm416, %v408, %v413
    %v418 = vmul.f32 %v387, %v417
    %v419 = vmul.f32 %v395, %v418
    %v420 = vsub.f32 %v388, %v419
    %v421 = vmul.f32 %v384, %v418
    %v422 = vadd.f32 %v421, %v420
    %vm423 = vcmp.ge.f32.partialorder %v422, 0.0
    %v424 = vmul.f32 %v422, 0.01
    %v425 = vsel %vm423, %v422, %v424
    %v426 = vld [vmem:[#allocation6 + $0x80] sm:$0xf]
    %v427 = vld [vmem:[#allocation6 + $0x84] sm:$0xf]
    %v428 = vld [vmem:[#allocation6 + $0x88] sm:$0xf]
    %v429 = vld [vmem:[#allocation6 + $0x8c] sm:$0xf]
    %v430 = vld [vmem:[#allocation6 + $0x90] sm:$0xf]
    %v431 = vld [vmem:[#allocation6 + $0x94] sm:$0xf]
    %v432 = vld [vmem:[#allocation6 + $0x98] sm:$0xf]
    %v433 = vld [vmem:[#allocation6 + $0x9c] sm:$0xf]
    %v434 = vld [vmem:[#allocation6 + $0xa0] sm:$0xf]
    %v435 = vld [vmem:[#allocation6 + $0xa4] sm:$0xf]
    %v436 = vld [vmem:[#allocation6 + $0xa8] sm:$0xf]
    %v437 = vld [vmem:[#allocation6 + $0xac] sm:$0xf]
    %v438 = vld [vmem:[#allocation6 + $0xb0] sm:$0xf]
    %v439 = vld [vmem:[#allocation6 + $0xb4] sm:$0xf]
    %v440 = vld [vmem:[#allocation6 + $0xb8] sm:$0xf]
    %v441 = vld [vmem:[#allocation6 + $0xbc] sm:$0xf]
    %v442 = vpack.c.bf16 %v425, %v425
    %v459 = vunpack.c.l.b16 %v426
    %v460 = vunpack.c.l.b16 %v427
    %v461 = vunpack.c.l.b16 %v428
    %v462 = vunpack.c.l.b16 %v429
    %v463 = vunpack.c.l.b16 %v430
    %v464 = vunpack.c.l.b16 %v431
    %v465 = vunpack.c.l.b16 %v432
    %v466 = vunpack.c.l.b16 %v433
    %v467 = vunpack.c.l.b16 %v434
    %v468 = vunpack.c.l.b16 %v435
    %v469 = vunpack.c.l.b16 %v436
    %v470 = vunpack.c.l.b16 %v437
    %v471 = vunpack.c.l.b16 %v438
    %v472 = vunpack.c.l.b16 %v439
    %v473 = vunpack.c.l.b16 %v440
    %v474 = vunpack.c.l.b16 %v441
    %v475 = vpack.c.b16 %v460, %v459
    %v476 = vpack.c.b16 %v462, %v461
    %v477 = vpack.c.b16 %v464, %v463
    %v478 = vpack.c.b16 %v466, %v465
    %v479 = vpack.c.b16 %v468, %v467
    %v480 = vpack.c.b16 %v470, %v469
    %v481 = vpack.c.b16 %v472, %v471
    %v482 = vpack.c.b16 %v474, %v473
    %491 = vmatpush.bf16.msra.mxu0 %v482
    %492 = vmatpush.bf16.msra.mxu0 %v481
    %493 = vmatpush.bf16.msra.mxu0 %v480
    %494 = vmatpush.bf16.msra.mxu0 %v479
    %495 = vmatpush.bf16.msra.mxu0 %v478
    %496 = vmatpush.bf16.msra.mxu0 %v477
    %497 = vmatpush.bf16.msra.mxu0 %v476
    %498 = vmatpush.bf16.msra.mxu0 %v475
    %499 = vmatmul.bf16.gmra.mxu0 %v442
    %v500 = vpop.f32.mrf.mxu0
    %v501 = vadd.f32 0.0, %v500
    %v502 = vpop.f32.mrf.mxu0
    %503 = vdwg.mxu0
    %v504 = vld [vmem:[#allocation7 + $0x2] ss:$0 sm:$0xff]
    %v505 = vld [vmem:[#allocation7 + $0x10] ss:$0 sm:$0xff]
    %v506 = vrot.slane %v501, 4
    %v507 = vadd.f32 %v501, %v506
    %v508 = vrot.slane %v507, 2
    %v509 = vadd.f32 %v507, %v508
    %v510 = vrot.slane %v509, 1
    %v511 = vadd.f32 %v509, %v510
    %v512 = vmul.f32 %v511, 0.125
    %v513 = vmul.f32 %v501, %v501
    %v514 = vrot.slane %v513, 4
    %v515 = vadd.f32 %v513, %v514
    %v516 = vrot.slane %v515, 2
    %v517 = vadd.f32 %v515, %v516
    %v518 = vrot.slane %v517, 1
    %v519 = vadd.f32 %v517, %v518
    %v520 = vmul.f32 %v519, 0.125
    %v521 = vmul.f32 %v512, %v512
    %v522 = vsub.f32 %v520, %v521
    %v523 = vmax.f32 %v522, 0.0
    %v524 = vadd.f32 %v523, 1e-05
    %v525 = vrsqrt.pop %v524
    %v526 = vmul.f32 %v525, %v524
    %v527 = vmul.f32 %v526, %v525
    %v528 = vmul.f32 0.5, %v527
    %v529 = vsub.f32 1.5, %v528
    %v530 = vmul.f32 %v525, %v529
    %vm531 = vweird.f32 %v524
    %vm532 = vweird.f32 %v525
    %vm533 = vmor %vm531, %vm532
    %v534 = vsel %vm533, %v525, %v530
    %v535 = vmul.f32 %v504, %v534
    %v536 = vmul.f32 %v512, %v535
    %v537 = vsub.f32 %v505, %v536
    %v538 = vmul.f32 %v501, %v535
    %v539 = vadd.f32 %v538, %v537
    %vm540 = vcmp.ge.f32.partialorder %v539, 0.0
    %v541 = vmul.f32 %v539, 0.01
    %v542 = vsel %vm540, %v539, %v541
    %v543 = vld [vmem:[#allocation6 + $0xc0] sm:$0xf]
    %v544 = vld [vmem:[#allocation6 + $0xc4] sm:$0xf]
    %v545 = vld [vmem:[#allocation6 + $0xc8] sm:$0xf]
    %v546 = vld [vmem:[#allocation6 + $0xcc] sm:$0xf]
    %v547 = vld [vmem:[#allocation6 + $0xd0] sm:$0xf]
    %v548 = vld [vmem:[#allocation6 + $0xd4] sm:$0xf]
    %v549 = vld [vmem:[#allocation6 + $0xd8] sm:$0xf]
    %v550 = vld [vmem:[#allocation6 + $0xdc] sm:$0xf]
    %v551 = vld [vmem:[#allocation6 + $0xe0] sm:$0xf]
    %v552 = vld [vmem:[#allocation6 + $0xe4] sm:$0xf]
    %v553 = vld [vmem:[#allocation6 + $0xe8] sm:$0xf]
    %v554 = vld [vmem:[#allocation6 + $0xec] sm:$0xf]
    %v555 = vld [vmem:[#allocation6 + $0xf0] sm:$0xf]
    %v556 = vld [vmem:[#allocation6 + $0xf4] sm:$0xf]
    %v557 = vld [vmem:[#allocation6 + $0xf8] sm:$0xf]
    %v558 = vld [vmem:[#allocation6 + $0xfc] sm:$0xf]
    %v559 = vpack.c.bf16 %v542, %v542
    %v576 = vunpack.c.l.b16 %v543
    %v577 = vunpack.c.l.b16 %v544
    %v578 = vunpack.c.l.b16 %v545
    %v579 = vunpack.c.l.b16 %v546
    %v580 = vunpack.c.l.b16 %v547
    %v581 = vunpack.c.l.b16 %v548
    %v582 = vunpack.c.l.b16 %v549
    %v583 = vunpack.c.l.b16 %v550
    %v584 = vunpack.c.l.b16 %v551
    %v585 = vunpack.c.l.b16 %v552
    %v586 = vunpack.c.l.b16 %v553
    %v587 = vunpack.c.l.b16 %v554
    %v588 = vunpack.c.l.b16 %v555
    %v589 = vunpack.c.l.b16 %v556
    %v590 = vunpack.c.l.b16 %v557
    %v591 = vunpack.c.l.b16 %v558
    %v592 = vpack.c.b16 %v577, %v576
    %v593 = vpack.c.b16 %v579, %v578
    %v594 = vpack.c.b16 %v581, %v580
    %v595 = vpack.c.b16 %v583, %v582
    %v596 = vpack.c.b16 %v585, %v584
    %v597 = vpack.c.b16 %v587, %v586
    %v598 = vpack.c.b16 %v589, %v588
    %v599 = vpack.c.b16 %v591, %v590
    %608 = vmatpush.bf16.msra.mxu0 %v599
    %609 = vmatpush.bf16.msra.mxu0 %v598
    %610 = vmatpush.bf16.msra.mxu0 %v597
    %611 = vmatpush.bf16.msra.mxu0 %v596
    %612 = vmatpush.bf16.msra.mxu0 %v595
    %613 = vmatpush.bf16.msra.mxu0 %v594
    %614 = vmatpush.bf16.msra.mxu0 %v593
    %615 = vmatpush.bf16.msra.mxu0 %v592
    %616 = vmatmul.bf16.gmra.mxu0 %v559
    %v617 = vpop.f32.mrf.mxu0
    %v618 = vadd.f32 0.0, %v617
    %v619 = vpop.f32.mrf.mxu0
    %620 = vdwg.mxu0
    %v621 = vld [vmem:[#allocation7 + $0x3] ss:$0 sm:$0xff]
    %v622 = vld [vmem:[#allocation7 + $0x11] ss:$0 sm:$0xff]
    %v623 = vrot.slane %v618, 4
    %v624 = vadd.f32 %v618, %v623
    %v625 = vrot.slane %v624, 2
    %v626 = vadd.f32 %v624, %v625
    %v627 = vrot.slane %v626, 1
    %v628 = vadd.f32 %v626, %v627
    %v629 = vmul.f32 %v628, 0.125
    %v630 = vmul.f32 %v618, %v618
    %v631 = vrot.slane %v630, 4
    %v632 = vadd.f32 %v630, %v631
    %v633 = vrot.slane %v632, 2
    %v634 = vadd.f32 %v632, %v633
    %v635 = vrot.slane %v634, 1
    %v636 = vadd.f32 %v634, %v635
    %v637 = vmul.f32 %v636, 0.125
    %v638 = vmul.f32 %v629, %v629
    %v639 = vsub.f32 %v637, %v638
    %v640 = vmax.f32 %v639, 0.0
    %v641 = vadd.f32 %v640, 1e-05
    %v642 = vrsqrt.pop %v641
    %v643 = vmul.f32 %v642, %v641
    %v644 = vmul.f32 %v643, %v642
    %v645 = vmul.f32 0.5, %v644
    %v646 = vsub.f32 1.5, %v645
    %v647 = vmul.f32 %v642, %v646
    %vm648 = vweird.f32 %v641
    %vm649 = vweird.f32 %v642
    %vm650 = vmor %vm648, %vm649
    %v651 = vsel %vm650, %v642, %v647
    %v652 = vmul.f32 %v621, %v651
    %v653 = vmul.f32 %v629, %v652
    %v654 = vsub.f32 %v622, %v653
    %v655 = vmul.f32 %v618, %v652
    %v656 = vadd.f32 %v655, %v654
    %vm657 = vcmp.ge.f32.partialorder %v656, 0.0
    %v658 = vmul.f32 %v656, 0.01
    %v659 = vsel %vm657, %v656, %v658
    %v660 = vld [vmem:[#allocation6 + $0x100] sm:$0xf]
    %v661 = vld [vmem:[#allocation6 + $0x104] sm:$0xf]
    %v662 = vld [vmem:[#allocation6 + $0x108] sm:$0xf]
    %v663 = vld [vmem:[#allocation6 + $0x10c] sm:$0xf]
    %v664 = vld [vmem:[#allocation6 + $0x110] sm:$0xf]
    %v665 = vld [vmem:[#allocation6 + $0x114] sm:$0xf]
    %v666 = vld [vmem:[#allocation6 + $0x118] sm:$0xf]
    %v667 = vld [vmem:[#allocation6 + $0x11c] sm:$0xf]
    %v668 = vld [vmem:[#allocation6 + $0x120] sm:$0xf]
    %v669 = vld [vmem:[#allocation6 + $0x124] sm:$0xf]
    %v670 = vld [vmem:[#allocation6 + $0x128] sm:$0xf]
    %v671 = vld [vmem:[#allocation6 + $0x12c] sm:$0xf]
    %v672 = vld [vmem:[#allocation6 + $0x130] sm:$0xf]
    %v673 = vld [vmem:[#allocation6 + $0x134] sm:$0xf]
    %v674 = vld [vmem:[#allocation6 + $0x138] sm:$0xf]
    %v675 = vld [vmem:[#allocation6 + $0x13c] sm:$0xf]
    %v676 = vpack.c.bf16 %v659, %v659
    %v693 = vunpack.c.l.b16 %v660
    %v694 = vunpack.c.l.b16 %v661
    %v695 = vunpack.c.l.b16 %v662
    %v696 = vunpack.c.l.b16 %v663
    %v697 = vunpack.c.l.b16 %v664
    %v698 = vunpack.c.l.b16 %v665
    %v699 = vunpack.c.l.b16 %v666
    %v700 = vunpack.c.l.b16 %v667
    %v701 = vunpack.c.l.b16 %v668
    %v702 = vunpack.c.l.b16 %v669
    %v703 = vunpack.c.l.b16 %v670
    %v704 = vunpack.c.l.b16 %v671
    %v705 = vunpack.c.l.b16 %v672
    %v706 = vunpack.c.l.b16 %v673
    %v707 = vunpack.c.l.b16 %v674
    %v708 = vunpack.c.l.b16 %v675
    %v709 = vpack.c.b16 %v694, %v693
    %v710 = vpack.c.b16 %v696, %v695
    %v711 = vpack.c.b16 %v698, %v697
    %v712 = vpack.c.b16 %v700, %v699
    %v713 = vpack.c.b16 %v702, %v701
    %v714 = vpack.c.b16 %v704, %v703
    %v715 = vpack.c.b16 %v706, %v705
    %v716 = vpack.c.b16 %v708, %v707
    %725 = vmatpush.bf16.msra.mxu0 %v716
    %726 = vmatpush.bf16.msra.mxu0 %v715
    %727 = vmatpush.bf16.msra.mxu0 %v714
    %728 = vmatpush.bf16.msra.mxu0 %v713
    %729 = vmatpush.bf16.msra.mxu0 %v712
    %730 = vmatpush.bf16.msra.mxu0 %v711
    %731 = vmatpush.bf16.msra.mxu0 %v710
    %732 = vmatpush.bf16.msra.mxu0 %v709
    %733 = vmatmul.bf16.gmra.mxu0 %v676
    %v734 = vpop.f32.mrf.mxu0
    %v735 = vadd.f32 0.0, %v734
    %v736 = vpop.f32.mrf.mxu0
    %737 = vdwg.mxu0
    %v738 = vld [vmem:[#allocation7 + $0x4] ss:$0 sm:$0xff]
    %v739 = vld [vmem:[#allocation7 + $0x12] ss:$0 sm:$0xff]
    %v740 = vrot.slane %v735, 4
    %v741 = vadd.f32 %v735, %v740
    %v742 = vrot.slane %v741, 2
    %v743 = vadd.f32 %v741, %v742
    %v744 = vrot.slane %v743, 1
    %v745 = vadd.f32 %v743, %v744
    %v746 = vmul.f32 %v745, 0.125
    %v747 = vmul.f32 %v735, %v735
    %v748 = vrot.slane %v747, 4
    %v749 = vadd.f32 %v747, %v748
    %v750 = vrot.slane %v749, 2
    %v751 = vadd.f32 %v749, %v750
    %v752 = vrot.slane %v751, 1
    %v753 = vadd.f32 %v751, %v752
    %v754 = vmul.f32 %v753, 0.125
    %v755 = vmul.f32 %v746, %v746
    %v756 = vsub.f32 %v754, %v755
    %v757 = vmax.f32 %v756, 0.0
    %v758 = vadd.f32 %v757, 1e-05
    %v759 = vrsqrt.pop %v758
    %v760 = vmul.f32 %v759, %v758
    %v761 = vmul.f32 %v760, %v759
    %v762 = vmul.f32 0.5, %v761
    %v763 = vsub.f32 1.5, %v762
    %v764 = vmul.f32 %v759, %v763
    %vm765 = vweird.f32 %v758
    %vm766 = vweird.f32 %v759
    %vm767 = vmor %vm765, %vm766
    %v768 = vsel %vm767, %v759, %v764
    %v769 = vmul.f32 %v738, %v768
    %v770 = vmul.f32 %v746, %v769
    %v771 = vsub.f32 %v739, %v770
    %v772 = vmul.f32 %v735, %v769
    %v773 = vadd.f32 %v772, %v771
    %vm774 = vcmp.ge.f32.partialorder %v773, 0.0
    %v775 = vmul.f32 %v773, 0.01
    %v776 = vsel %vm774, %v773, %v775
    %v777 = vld [vmem:[#allocation6 + $0x140] sm:$0xf]
    %v778 = vld [vmem:[#allocation6 + $0x144] sm:$0xf]
    %v779 = vld [vmem:[#allocation6 + $0x148] sm:$0xf]
    %v780 = vld [vmem:[#allocation6 + $0x14c] sm:$0xf]
    %v781 = vld [vmem:[#allocation6 + $0x150] sm:$0xf]
    %v782 = vld [vmem:[#allocation6 + $0x154] sm:$0xf]
    %v783 = vld [vmem:[#allocation6 + $0x158] sm:$0xf]
    %v784 = vld [vmem:[#allocation6 + $0x15c] sm:$0xf]
    %v785 = vld [vmem:[#allocation6 + $0x160] sm:$0xf]
    %v786 = vld [vmem:[#allocation6 + $0x164] sm:$0xf]
    %v787 = vld [vmem:[#allocation6 + $0x168] sm:$0xf]
    %v788 = vld [vmem:[#allocation6 + $0x16c] sm:$0xf]
    %v789 = vld [vmem:[#allocation6 + $0x170] sm:$0xf]
    %v790 = vld [vmem:[#allocation6 + $0x174] sm:$0xf]
    %v791 = vld [vmem:[#allocation6 + $0x178] sm:$0xf]
    %v792 = vld [vmem:[#allocation6 + $0x17c] sm:$0xf]
    %v793 = vpack.c.bf16 %v776, %v776
    %v810 = vunpack.c.l.b16 %v777
    %v811 = vunpack.c.l.b16 %v778
    %v812 = vunpack.c.l.b16 %v779
    %v813 = vunpack.c.l.b16 %v780
    %v814 = vunpack.c.l.b16 %v781
    %v815 = vunpack.c.l.b16 %v782
    %v816 = vunpack.c.l.b16 %v783
    %v817 = vunpack.c.l.b16 %v784
    %v818 = vunpack.c.l.b16 %v785
    %v819 = vunpack.c.l.b16 %v786
    %v820 = vunpack.c.l.b16 %v787
    %v821 = vunpack.c.l.b16 %v788
    %v822 = vunpack.c.l.b16 %v789
    %v823 = vunpack.c.l.b16 %v790
    %v824 = vunpack.c.l.b16 %v791
    %v825 = vunpack.c.l.b16 %v792
    %v826 = vpack.c.b16 %v811, %v810
    %v827 = vpack.c.b16 %v813, %v812
    %v828 = vpack.c.b16 %v815, %v814
    %v829 = vpack.c.b16 %v817, %v816
    %v830 = vpack.c.b16 %v819, %v818
    %v831 = vpack.c.b16 %v821, %v820
    %v832 = vpack.c.b16 %v823, %v822
    %v833 = vpack.c.b16 %v825, %v824
    %842 = vmatpush.bf16.msra.mxu0 %v833
    %843 = vmatpush.bf16.msra.mxu0 %v832
    %844 = vmatpush.bf16.msra.mxu0 %v831
    %845 = vmatpush.bf16.msra.mxu0 %v830
    %846 = vmatpush.bf16.msra.mxu0 %v829
    %847 = vmatpush.bf16.msra.mxu0 %v828
    %848 = vmatpush.bf16.msra.mxu0 %v827
    %849 = vmatpush.bf16.msra.mxu0 %v826
    %850 = vmatmul.bf16.gmra.mxu0 %v793
    %v851 = vpop.f32.mrf.mxu0
    %v852 = vadd.f32 0.0, %v851
    %v853 = vpop.f32.mrf.mxu0
    %854 = vdwg.mxu0
    %v855 = vld [vmem:[#allocation7 + $0x5] ss:$0 sm:$0xff]
    %v856 = vld [vmem:[#allocation7 + $0x13] ss:$0 sm:$0xff]
    %v857 = vrot.slane %v852, 4
    %v858 = vadd.f32 %v852, %v857
    %v859 = vrot.slane %v858, 2
    %v860 = vadd.f32 %v858, %v859
    %v861 = vrot.slane %v860, 1
    %v862 = vadd.f32 %v860, %v861
    %v863 = vmul.f32 %v862, 0.125
    %v864 = vmul.f32 %v852, %v852
    %v865 = vrot.slane %v864, 4
    %v866 = vadd.f32 %v864, %v865
    %v867 = vrot.slane %v866, 2
    %v868 = vadd.f32 %v866, %v867
    %v869 = vrot.slane %v868, 1
    %v870 = vadd.f32 %v868, %v869
    %v871 = vmul.f32 %v870, 0.125
    %v872 = vmul.f32 %v863, %v863
    %v873 = vsub.f32 %v871, %v872
    %v874 = vmax.f32 %v873, 0.0
    %v875 = vadd.f32 %v874, 1e-05
    %v876 = vrsqrt.pop %v875
    %v877 = vmul.f32 %v876, %v875
    %v878 = vmul.f32 %v877, %v876
    %v879 = vmul.f32 0.5, %v878
    %v880 = vsub.f32 1.5, %v879
    %v881 = vmul.f32 %v876, %v880
    %vm882 = vweird.f32 %v875
    %vm883 = vweird.f32 %v876
    %vm884 = vmor %vm882, %vm883
    %v885 = vsel %vm884, %v876, %v881
    %v886 = vmul.f32 %v855, %v885
    %v887 = vmul.f32 %v863, %v886
    %v888 = vsub.f32 %v856, %v887
    %v889 = vmul.f32 %v852, %v886
    %v890 = vadd.f32 %v889, %v888
    %vm891 = vcmp.ge.f32.partialorder %v890, 0.0
    %v892 = vmul.f32 %v890, 0.01
    %v893 = vsel %vm891, %v890, %v892
    %v894 = vld [vmem:[#allocation7 + $0x14] ss:$0 sm:$0xff]
    %v895 = vld [vmem:[#allocation7 + $0x15] ss:$0 sm:$0xff]
    %v896 = vmul.f32 %v893, %v894
    %897 = vadd.xlane.f32.xlu0 %v896
    %v898 = vpop.xlane.xlu0 %897
    %v899 = vadd.f32 %v898, %v895
    %900 = vst [vmem:[%s4] sm:$0xff] %v899
    // Predicated region
    $region34: #{mynet_forward.1} parent=1 // pred_check
      _
    $region35: #{mynet_forward.1} parent=1 // pred_check_branch
      %902 = sbr.rel (0) target = $region37
    $region36: #{mynet_forward.1} parent=1 // pred_region
      _
    $region37: #{mynet_forward.1} parent=1 // pred_fallthru
      _
    // Predicated region
    $region38: #{mynet_forward.1} parent=1 // pred_check
      _
    $region39: #{mynet_forward.1} parent=1 // pred_check_branch
      %904 = sbr.rel (0) target = $region41
    $region40: #{mynet_forward.1} parent=1 // pred_region
      _
    $region41: #{mynet_forward.1} parent=1 // pred_fallthru
      _
    %905 = vsyncpa [#allocation3], 1
    %906 = vsyncpa [#allocation5], 1
    %907 = vsyncpa [#allocation8], 1

</llo_original>
